<compile_context>
chip_gen: v7x
topology: tpu7x:2x2x1
jax: 0.10.0
libtpu: 0.0.40
codegen_flags: <defaults>
</compile_context>

<pallas_src>
import functools

import jax
import jax.numpy as jnp
from jax.experimental import pallas as pl
from jax.experimental.pallas import tpu as pltpu


def _rotate_kernel(x_ref, w_ref, o_ref, *, compute_dtype):
    # x_ref: (tm, n) row tile of x; w_ref: (n, tn) tile of W (tn == n when W
    # is fully resident).  x is cast per-tile here (avoids a wrapper-side HBM
    # pass); the MXU accumulates in f32; result cast back to the output dtype.
    x = x_ref[...]
    if x.dtype != compute_dtype:
        x = x.astype(compute_dtype)
    o_ref[...] = jnp.dot(
        x, w_ref[...], preferred_element_type=jnp.float32
    ).astype(o_ref.dtype)


def _round_up(v, mult):
    return ((v + mult - 1) // mult) * mult


def _vmem_capacity_bytes():
    # Trace-time hardware query; fall back to the smallest per-TC VMEM of the
    # supported generations (v7x: 64 MiB) so sizing is always safe.
    try:
        cap = getattr(pltpu.get_tpu_info(), "vmem_capacity_bytes", None)
        if cap:
            return int(cap)
    except Exception:
        pass
    return 64 << 20


_TM_CANDIDATES = (512, 256, 128, 64, 32, 16, 8)


def rotate_layer_forward(x, weight, *, compute_dtype=None, w_resident=None):
    """y = x @ weight over the last axis of x (RotateLayer.forward).

    compute_dtype: optional MXU-operand dtype (e.g. jnp.bfloat16). x is cast
      per-tile inside the kernel; accumulation is f32; output keeps x.dtype.
    w_resident: force (True) / forbid (False) the W-fully-resident layout;
      None = decide automatically from the VMEM budget.
    """
    n = weight.shape[0]
    assert weight.shape == (n, n)
    assert x.shape[-1] == n

    out_dtype = x.dtype
    lead_shape = x.shape[:-1]
    x2d = x.reshape(-1, n)
    m = x2d.shape[0]

    cdt = jnp.dtype(compute_dtype) if compute_dtype is not None else jnp.dtype(x.dtype)
    w = weight.astype(cdt)  # n*n elements only; negligible next to activations

    x_bytes = x2d.dtype.itemsize
    w_bytes = w.dtype.itemsize
    o_bytes = jnp.dtype(out_dtype).itemsize

    cap = _vmem_capacity_bytes()
    budget = int(0.70 * cap)  # headroom for compiler scratch / double buffers

    max_tm = max(8, _round_up(min(m, _TM_CANDIDATES[0]), 8))

    # --- layout selection ----------------------------------------------------
    def fits_resident(tm):
        # W counted double-buffered for safety even though its constant block
        # index means it is only fetched once.
        return (2 * n * n * w_bytes + 2 * tm * n * (x_bytes + o_bytes)) <= budget

    tm_res = next((t for t in _TM_CANDIDATES if t <= max_tm and fits_resident(t)), None)
    use_resident = (tm_res is not None) if w_resident is None else bool(w_resident)

    if use_resident:
        # ---- Path A: W fully resident in VMEM; rows streamed ----------------
        tm = tm_res if tm_res is not None else 8
        # Keep both megacore TensorCores busy when there is enough work.
        if pl.cdiv(m, tm) < 2 and m >= 64:
            tm = max(8, _round_up(pl.cdiv(m, 2), 8))

        grid = (pl.cdiv(m, tm),)
        in_specs = [
            pl.BlockSpec((tm, n), lambda i: (i, 0)),
            pl.BlockSpec((n, n), lambda i: (0, 0)),  # constant -> fetched once
        ]
        out_spec = pl.BlockSpec((tm, n), lambda i: (i, 0))
        dims = ("parallel",)
        n_out = n
        vmem_need = 2 * n * n * w_bytes + 2 * tm * n * (x_bytes + o_bytes)
    else:
        # ---- Path B: column-striped fallback (W too large to be resident) ---
        # Column axis is OUTER so each W column tile stays resident across all
        # row tiles of a stripe: W HBM traffic = n_p^2 bytes total, x is
        # re-read once per stripe.
        n_p = _round_up(n, 128)
        if n_p != n:
            x2d = jnp.pad(x2d, ((0, 0), (0, n_p - n)))
            w = jnp.pad(w, ((0, n_p - n), (0, n_p - n)))
        tn = next((t for t in (512, 256, 128) if n_p % t == 0), 128)

        def fits_striped(tm):
            return (2 * n_p * tn * w_bytes
                    + 2 * tm * n_p * x_bytes
                    + 2 * tm * tn * o_bytes) <= budget

        tm = next((t for t in _TM_CANDIDATES if t <= max_tm and fits_striped(t)), None)
        if tm is None:
            # TODO(synk): add a K-tiled (reduction grid axis + f32 VMEM
            # accumulator) variant for extremely large n on v7x's 64 MiB VMEM.
            tm = 8

        grid = (n_p // tn, pl.cdiv(m, tm))
        in_specs = [
            pl.BlockSpec((tm, n_p), lambda j, i: (i, 0)),
            pl.BlockSpec((n_p, tn), lambda j, i: (0, j)),
        ]
        out_spec = pl.BlockSpec((tm, tn), lambda j, i: (i, j))
        dims = ("parallel", "parallel")
        n_out = n_p
        vmem_need = 2 * (n_p * tn * w_bytes + tm * n_p * x_bytes + tm * tn * o_bytes)

    # --- VMEM limit clamped to the device (v7x safe) --------------------------
    vmem_cap_limit = int(0.9 * cap)
    vmem_limit = int(min(vmem_need + (8 << 20), vmem_cap_limit))
    vmem_limit = max(vmem_limit, min(32 << 20, vmem_cap_limit))

    cost = pl.CostEstimate(
        flops=2 * m * n_out * n_out,
        transcendentals=0,
        bytes_accessed=(m * n_out * x_bytes
                        + n_out * n_out * w_bytes
                        + m * n_out * o_bytes),
    )

    kernel = functools.partial(_rotate_kernel, compute_dtype=cdt)

    out2d = pl.pallas_call(
        kernel,
        out_shape=jax.ShapeDtypeStruct((m, n_out), out_dtype),
        grid_spec=pltpu.PrefetchScalarGridSpec(
            num_scalar_prefetch=0,
            grid=grid,
            in_specs=in_specs,
            out_specs=out_spec,
        ),
        compiler_params=pltpu.CompilerParams(
            dimension_semantics=dims,
            vmem_limit_bytes=vmem_limit,
        ),
        cost_estimate=cost,
    )(x2d, w)

    if n_out != n:
        out2d = out2d[:, :n]
    return out2d.reshape(*lead_shape, n)


def make_orthogonal_weight(key, n, dtype=jnp.float32):
    """Deterministic orthogonal n x n matrix (stand-in for the orthogonal
    parametrization of Matrix.weight in RotateLayer)."""
    a = jax.random.normal(key, (n, n), dtype=jnp.float32)
    q, r = jnp.linalg.qr(a)
    d = jnp.diagonal(r)
    q = q * jnp.where(d >= 0, 1.0, -1.0)[None, :]
    return q.astype(dtype)


if __name__ == "__main__":
    key = jax.random.PRNGKey(0)
    kx, kw, kx2, kw2 = jax.random.split(key, 4)

    # --- primary demo: RotateLayer(n=32) on (batch=2, seq=8, hidden=32) ------
    n = 32
    batch, seq = 2, 8
    x = jax.random.normal(kx, (batch, seq, n), dtype=jnp.float32)
    w = make_orthogonal_weight(kw, n)

    y = jax.block_until_ready(rotate_layer_forward(x, w))
    y_ref = jnp.matmul(x, w, precision=jax.lax.Precision.HIGHEST)
    assert y.shape == x.shape and y.dtype == x.dtype
    assert jnp.allclose(y, y_ref, atol=1e-4, rtol=1e-4), "f32 mismatch vs reference"

    # Orthogonality sanity: y @ W.T should recover x (RotateLayer.inverse).
    x_rec = jnp.matmul(y, w.T, precision=jax.lax.Precision.HIGHEST)
    assert jnp.allclose(x_rec, x, atol=1e-3, rtol=1e-3)

    # bf16 MXU-operand path (x cast per-tile in-kernel, f32 accumulation,
    # loose tolerance is inherent to bf16 operands).
    y_bf16 = jax.block_until_ready(
        rotate_layer_forward(x, w, compute_dtype=jnp.bfloat16))
    assert y_bf16.dtype == x.dtype
    assert jnp.allclose(y_bf16, y_ref, atol=1e-1, rtol=5e-2)

    # Column-striped fallback layout (forced) -- exercises the large-n path.
    y_striped = jax.block_until_ready(rotate_layer_forward(x, w, w_resident=False))
    assert jnp.allclose(y_striped, y_ref, atol=1e-4, rtol=1e-4)

    # Ragged row count + lane-aligned hidden size: exercises the partial edge
    # row block (m % tm != 0 handled by Pallas, no wrapper-side row padding).
    n2, m2 = 256, 37
    x2 = jax.random.normal(kx2, (m2, n2), dtype=jnp.float32)
    w2 = make_orthogonal_weight(kw2, n2)
    y2 = jax.block_until_ready(rotate_layer_forward(x2, w2))
    y2_ref = jnp.matmul(x2, w2, precision=jax.lax.Precision.HIGHEST)
    assert jnp.allclose(y2, y2_ref, atol=2e-4, rtol=2e-4)

    print("KERNEL_OK")
</pallas_src>

<mosaic_0001>
module attributes {stable_mosaic.version = 11 : i64} {
  func.func @_rotate_kernel(%arg0: i32, %arg1: memref<16x32xf32, #tpu.memory_space<vmem>>, %arg2: memref<32x32xf32, #tpu.memory_space<vmem>>, %arg3: memref<16x32xf32, #tpu.memory_space<vmem>>) attributes {dimension_semantics = [#tpu.dimension_semantics<parallel>], iteration_bounds = array<i64: 1>, scalar_prefetch = 0 : i64, scratch_operands = 0 : i64, tpu.core_type = #tpu.core_type<tc>, window_params = [{transform_indices = @transform_0, window_bounds = array<i64: 16, 32>}, {pipeline_mode = #tpu.pipeline_mode<synchronous>, transform_indices = @transform_1, window_bounds = array<i64: 32, 32>}, {transform_indices = @transform_2, window_bounds = array<i64: 16, 32>}]} {
    %c0 = arith.constant 0 : index
    %c0_0 = arith.constant 0 : index
    %0 = vector.load %arg1[%c0, %c0_0] : memref<16x32xf32, #tpu.memory_space<vmem>>, vector<16x32xf32>
    %c0_1 = arith.constant 0 : index
    %c0_2 = arith.constant 0 : index
    %1 = vector.load %arg2[%c0_1, %c0_2] : memref<32x32xf32, #tpu.memory_space<vmem>>, vector<32x32xf32>
    %cst = arith.constant dense<0.000000e+00> : vector<16x32xf32>
    %2 = tpu.matmul %0, %1, %cst {dimension_numbers = #tpu.dot_dimension_numbers<[1], [0], [0], [1], [0, 0, 1, 1], [], []>} : vector<16x32xf32>, vector<32x32xf32>, vector<16x32xf32> -> vector<16x32xf32>
    %c0_3 = arith.constant 0 : index
    %c0_4 = arith.constant 0 : index
    %3 = vector.load %arg3[%c0_3, %c0_4] : memref<16x32xf32, #tpu.memory_space<vmem>>, vector<16x32xf32>
    tpu.vector_store %arg3[%c0_3, %c0_4], %2 {strides = array<i32>} : memref<16x32xf32, #tpu.memory_space<vmem>>, vector<16x32xf32>,
    return
  }
  func.func @transform_0(%arg0: i32) -> (i32, i32) {
    %c0_i32 = arith.constant 0 : i32
    %c0_i32_0 = arith.constant 0 : i32
    return %arg0, %c0_i32 : i32, i32
  }
  func.func @transform_1(%arg0: i32) -> (i32, i32) {
    %c0_i32 = arith.constant 0 : i32
    %c0_i32_0 = arith.constant 0 : i32
    %c0_i32_1 = arith.constant 0 : i32
    return %c0_i32, %c0_i32_0 : i32, i32
  }
  func.func @transform_2(%arg0: i32) -> (i32, i32) {
    %c0_i32 = arith.constant 0 : i32
    %c0_i32_0 = arith.constant 0 : i32
    return %arg0, %c0_i32 : i32, i32
  }
}

</mosaic_0001>

<llo_original>
// kernel: tpu_custom_call.1
$region0: #{tpu_custom_call.1}
  #allocation0 [shape = 'u32[]', space=smem, size = 0x4, offset = 0x4, fixed_abs, tag = 'smem constant byte address 0x4 - core index']
  #allocation1 [shape = 'u32[144,128]{1,0:T(1,128)}', space=vmem, size = 0x12000, scoped, tag = 'internal scratch']
  %s0 = inlined_call_operand.hbm [shape: f32[16,32], index: 0, kind: input, shape index: {}]
  %s1 = inlined_call_operand.hbm [shape: f32[32,32], index: 1, kind: input, shape index: {}]
  %s2 = inlined_call_operand.hbm [shape: f32[16,32], index: 2, kind: output, shape index: {}]
  %s3 = sld [smem:[#allocation0]]
  $region26: #{tpu_custom_call.1} parent=0
    _
  %s5 = ssub.s32 1, %s3
  %s6 = scalar_select 0, %s5, %s3
  $region1: #{tpu_custom_call.1} parent=0
    #allocation2 [shape = 'u8[8192]{0}', space=vmem, size = 0x2000, scoped, tag = 'input window, operand 0, single buffered']
    #allocation3 [shape = 's32[1]{0}', space=sflag, size = 0x4, scoped, tag = 'scoped memory for tpu_custom_call.1']
    #allocation4 [shape = 's32[1]{0}', space=sflag, size = 0x4, scoped, tag = 'scoped memory for tpu_custom_call.1']
    #allocation5 [shape = 'u8[16384]{0}', space=vmem, size = 0x4000, scoped, tag = 'input window, operand 1, single buffered']
    #allocation6 [shape = 's32[1]{0}', space=sflag, size = 0x4, scoped, tag = 'scoped memory for tpu_custom_call.1']
    #allocation7 [shape = 'u8[8192]{0}', space=vmem, size = 0x2000, scoped, tag = 'output window, operand 0, single buffered']
    %7 = vsyncpa [#allocation3], 0
    %8 = vsyncpa [#allocation6], 0
    %9 = vsyncpa [#allocation4], 0
    // Predicated region
    $region2: #{tpu_custom_call.1} parent=1 // pred_check
      _
    $region3: #{tpu_custom_call.1} parent=1 // pred_check_branch
      %11 = sbr.rel (0) target = $region5
    $region4: #{tpu_custom_call.1} parent=1 // pred_region
      %s13 = ssub.s32 256, 256
      %14 = vsyncadd [#allocation3], %s13
      %s15 = sshll.u32 [#allocation2], 4
      %s16 = int_to_ptr.vmem [resolvable:$true] %s15
      %21 = dma.hbm_to_vmem [thread:$0]  %s0, 256, %s16, [#allocation3], 128, 128, 8
    $region5: #{tpu_custom_call.1} parent=1 // pred_fallthru
      _
    // Predicated region
    $region6: #{tpu_custom_call.1} parent=1 // pred_check
      _
    $region7: #{tpu_custom_call.1} parent=1 // pred_check_branch
      %23 = sbr.rel (0) target = $region9
    $region8: #{tpu_custom_call.1} parent=1 // pred_region
      %s25 = ssub.s32 512, 512
      %26 = vsyncadd [#allocation6], %s25
      %s27 = sshll.u32 [#allocation5], 4
      %s28 = int_to_ptr.vmem [resolvable:$true] %s27
      %33 = dma.hbm_to_vmem [thread:$0]  %s1, 512, %s28, [#allocation6], 128, 128, 8
    $region9: #{tpu_custom_call.1} parent=1 // pred_fallthru
      _
    // Predicated region
    $region10: #{tpu_custom_call.1} parent=1 // pred_check
      _
    $region11: #{tpu_custom_call.1} parent=1 // pred_check_branch
      %35 = sbr.rel (0) target = $region13
    $region12: #{tpu_custom_call.1} parent=1 // pred_region
      %36 = dma.done [#allocation3], 256
    $region13: #{tpu_custom_call.1} parent=1 // pred_fallthru
      _
    // Predicated region
    $region14: #{tpu_custom_call.1} parent=1 // pred_check
      _
    $region15: #{tpu_custom_call.1} parent=1 // pred_check_branch
      %38 = sbr.rel (0) target = $region17
    $region16: #{tpu_custom_call.1} parent=1 // pred_region
      %39 = dma.done [#allocation6], 512
    $region17: #{tpu_custom_call.1} parent=1 // pred_fallthru
      _
    %v40 = vld [vmem:[#allocation2] sm:$0xff]
    %v41 = vld [vmem:[#allocation2 + $0x8] sm:$0xff]
    %v42 = vld [vmem:[#allocation5] sm:$0xff]
    %v43 = vld [vmem:[#allocation5 + $0x8] sm:$0xff]
    %v44 = vld [vmem:[#allocation5 + $0x10] sm:$0xff]
    %v45 = vld [vmem:[#allocation5 + $0x18] sm:$0xff]
    %vm46 = vcmask 261120
    %v48 = vsel %vm46, %v40, 0
    %v51 = vsel %vm46, %v41, 0
    %53 = vmatprep.subr.mxu0 0.0
    %54 = vmatpush1.msra.mxu0 %v42
    %55 = vmatprep.subr.mxu0 0.0
    %56 = vmatpush1.msra.mxu0 %v43
    %57 = vmatprep.subr.mxu0 0.0
    %58 = vmatpush1.msra.mxu0 %v44
    %59 = vmatprep.subr.mxu0 0.0
    %60 = vmatpush1.msra.mxu0 %v45
    %61 = vmatprep.subr.mxu0 0.0
    %62 = vmatpush1.msra.mxu0 0.0
    %63 = vmatprep.subr.mxu0 0.0
    %64 = vmatpush1.msra.mxu0 0.0
    %65 = vmatprep.subr.mxu0 0.0
    %66 = vmatpush1.msra.mxu0 0.0
    %67 = vmatprep.subr.mxu0 0.0
    %68 = vmatpush1.msra.mxu0 0.0
    %69 = vmatprep.subr.mxu0 0.0
    %70 = vmatpush1.msra.mxu0 0.0
    %71 = vmatprep.subr.mxu0 0.0
    %72 = vmatpush1.msra.mxu0 0.0
    %73 = vmatprep.subr.mxu0 0.0
    %74 = vmatpush1.msra.mxu0 0.0
    %75 = vmatprep.subr.mxu0 0.0
    %76 = vmatpush1.msra.mxu0 0.0
    %77 = vmatprep.subr.mxu0 0.0
    %78 = vmatpush1.msra.mxu0 0.0
    %79 = vmatprep.subr.mxu0 0.0
    %80 = vmatpush1.msra.mxu0 0.0
    %81 = vmatprep.subr.mxu0 0.0
    %82 = vmatpush1.msra.mxu0 0.0
    %83 = vmatprep.subr.mxu0 0.0
    %84 = vmatpush1.msra.mxu0 0.0
    %85 = vmatprep.subr.mxu0 0.0
    %86 = vmatpush1.msra.mxu0 0.0
    %87 = vmatprep.subr.mxu0 0.0
    %88 = vmatpush1.msra.mxu0 0.0
    %89 = vmatprep.subr.mxu0 0.0
    %90 = vmatpush1.msra.mxu0 0.0
    %91 = vmatprep.subr.mxu0 0.0
    %92 = vmatpush1.msra.mxu0 0.0
    %93 = vmatprep.subr.mxu0 0.0
    %94 = vmatpush1.msra.mxu0 0.0
    %95 = vmatprep.subr.mxu0 0.0
    %96 = vmatpush1.msra.mxu0 0.0
    %97 = vmatprep.subr.mxu0 0.0
    %98 = vmatpush1.msra.mxu0 0.0
    %99 = vmatprep.subr.mxu0 0.0
    %100 = vmatpush1.msra.mxu0 0.0
    %101 = vmatprep.subr.mxu0 0.0
    %102 = vmatpush1.msra.mxu0 0.0
    %103 = vmatprep.subr.mxu0 0.0
    %104 = vmatpush1.msra.mxu0 0.0
    %105 = vmatprep.subr.mxu0 0.0
    %106 = vmatpush1.msra.mxu0 0.0
    %107 = vmatprep.subr.mxu0 0.0
    %108 = vmatpush1.msra.mxu0 0.0
    %109 = vmatprep.subr.mxu0 0.0
    %110 = vmatpush1.msra.mxu0 0.0
    %111 = vmatprep.subr.mxu0 0.0
    %112 = vmatpush1.msra.mxu0 0.0
    %113 = vmatprep.subr.mxu0 0.0
    %114 = vmatpush1.msra.mxu0 0.0
    %115 = vmatprep.subr.mxu0 0.0
    %116 = vmatpush1.msra.mxu0 0.0
    %117 = vmatprep.mubr.f32.mxu0 0.0
    %118 = vmatmul.mubr.f32.gmra.mrb[0].mxu0 %v48
    %v119 = vpop.f32.mrb[0].mxu0
    %v120 = vadd.f32 0.0, %v119
    %v121 = vpop.f32.mrb[0].mxu0
    %122 = vmatprep.mubr.f32.mxu0 0.0
    %123 = vmatmul.mubr.f32.gmra.mrb[0].mxu0 %v51
    %v124 = vpop.f32.mrb[0].mxu0
    %v125 = vadd.f32 0.0, %v124
    %v126 = vpop.f32.mrb[0].mxu0
    %127 = vdwg.mxu0
    %128 = vst.msk [vmem:[#allocation7] sm:$0xff] %vm46, %v120
    %129 = vst.msk [vmem:[#allocation7 + $0x8] sm:$0xff] %vm46, %v125
    // Predicated region
    $region18: #{tpu_custom_call.1} parent=1 // pred_check
      _
    $region19: #{tpu_custom_call.1} parent=1 // pred_check_branch
      %131 = sbr.rel (0) target = $region21
    $region20: #{tpu_custom_call.1} parent=1 // pred_region
      %s133 = ssub.s32 256, 256
      %134 = vsyncadd [#allocation4], %s133
      %s135 = sshll.u32 [#allocation7], 4
      %s136 = int_to_ptr.vmem [resolvable:$true] %s135
      %141 = dma.vmem_to_hbm [thread:$0]  %s136, 256, %s2, [#allocation4], 128, 128, 8
    $region21: #{tpu_custom_call.1} parent=1 // pred_fallthru
      _
    // Predicated region
    $region22: #{tpu_custom_call.1} parent=1 // pred_check
      _
    $region23: #{tpu_custom_call.1} parent=1 // pred_check_branch
      %143 = sbr.rel (0) target = $region25
    $region24: #{tpu_custom_call.1} parent=1 // pred_region
      %144 = dma.done [#allocation4], 256
    $region25: #{tpu_custom_call.1} parent=1 // pred_fallthru
      _
    %145 = vsyncpa [#allocation3], 1
    %146 = vsyncpa [#allocation6], 1
    %147 = vsyncpa [#allocation4], 1

</llo_original>
